<compile_context>
chip_gen: v7x
topology: tpu7x:2x2x1
jax: 0.10.0
libtpu: 0.0.40
codegen_flags: <defaults>
</compile_context>

<pallas_src>
import functools

import jax
import jax.numpy as jnp
from jax.experimental import pallas as pl
from jax.experimental.pallas import tpu as pltpu


def _round_up(n, m):
    return ((n + m - 1) // m) * m


def _linear_relu_kernel(x_ref, w_ref, b_ref, o_ref):
    # x_ref: (tm, D), w_ref: (D, Fp), b_ref: (1, Fp), o_ref: (tm, Fp)
    y = jnp.dot(x_ref[...], w_ref[...], preferred_element_type=jnp.float32)
    y = y + b_ref[...]                       # broadcast (1, Fp) -> (tm, Fp)
    o_ref[...] = jnp.maximum(y, 0.0).astype(o_ref.dtype)


def pad_params(w_t, b):
    """Pad weight (D,F)->(D,Fp) and bias (F,)->(1,Fp) ONCE, outside the hot path.

    Fp is the true out_features rounded up to 8 (sublane-friendly, tiny
    writeback).  Padded columns are zero, so ReLU keeps them exactly zero.
    """
    D, F = w_t.shape
    Fp = _round_up(max(F, 8), 8)
    w_pad = jnp.zeros((D, Fp), jnp.float32).at[:, :F].set(w_t.astype(jnp.float32))
    b_pad = jnp.zeros((1, Fp), jnp.float32).at[0, :F].set(b.astype(jnp.float32))
    return w_pad, b_pad


@functools.partial(jax.jit, static_argnames=("out_features", "block_m"))
def linear_relu(x, w_pad, b_pad, *, out_features, block_m=4096):
    """x: (B, D) f32, w_pad: (D, Fp) f32, b_pad: (1, Fp) f32 -> (B, out_features) f32."""
    B, D = x.shape
    Fp = w_pad.shape[1]

    # Validate / round the batch tile to a multiple of 8 (sublane constraint).
    block_m = max(8, _round_up(block_m, 8))
    B8 = _round_up(B, 8)

    # Enough tiles to respect block_m; force >=2 tiles for large batches so the
    # "parallel" batch axis shards across v7x's two TensorCores (no-op on
    # single-TC v5e/v6e, where it just halves the already-large tile).
    ntiles = max(-(-B8 // block_m), 2 if B8 >= 2048 else 1)
    tm = _round_up(-(-B8 // ntiles), 8)
    Bp = tm * ntiles

    # Minimal batch padding (< 8*ntiles rows); skipped entirely when B divides.
    x_pad = x if Bp == B else jnp.pad(x, ((0, Bp - B), (0, 0)))

    out = pl.pallas_call(
        _linear_relu_kernel,
        out_shape=jax.ShapeDtypeStruct((Bp, Fp), jnp.float32),
        grid_spec=pltpu.PrefetchScalarGridSpec(
            num_scalar_prefetch=0,
            grid=(ntiles,),
            in_specs=[
                pl.BlockSpec((tm, D), lambda i: (i, 0)),   # x tile, pipelined
                pl.BlockSpec((D, Fp), lambda i: (0, 0)),   # W resident
                pl.BlockSpec((1, Fp), lambda i: (0, 0)),   # b resident
            ],
            out_specs=pl.BlockSpec((tm, Fp), lambda i: (i, 0)),
        ),
        compiler_params=pltpu.CompilerParams(
            dimension_semantics=("parallel",)),  # batch tiles independent
    )(x_pad, w_pad, b_pad)

    # Slice back to the true (B, out_features) result.  Padded rows of the
    # intermediate buffer hold ReLU(b) and must never be consumed unsliced.
    return out[:B, :out_features]


def init_params(key, input_dim, out_features=2):
    """Deterministic init mimicking nn.Linear's default U(-1/sqrt(in), 1/sqrt(in))."""
    kw, kb = jax.random.split(key)
    bound = 1.0 / jnp.sqrt(jnp.float32(input_dim))
    # PyTorch stores weight as (out, in); we keep it transposed (in, out).
    w_t = jax.random.uniform(kw, (input_dim, out_features), jnp.float32,
                             minval=-bound, maxval=bound)
    b = jax.random.uniform(kb, (out_features,), jnp.float32,
                           minval=-bound, maxval=bound)
    return w_t, b


if __name__ == "__main__":
    key = jax.random.PRNGKey(0)
    k_x, k_p = jax.random.split(key)

    batch, input_dim, out_features = 8, 32, 2
    x = jax.random.normal(k_x, (batch, input_dim), jnp.float32)
    w_t, b = init_params(k_p, input_dim, out_features)

    # Parameter padding happens once, at "model load" time.
    w_pad, b_pad = pad_params(w_t, b)

    out = jax.block_until_ready(
        linear_relu(x, w_pad, b_pad, out_features=out_features))

    # Sanity check vs. plain JAX reference.
    ref = jnp.maximum(x @ w_t + b, 0.0)
    assert out.shape == (batch, out_features)
    assert jnp.allclose(out, ref, atol=1e-5, rtol=1e-5)

    # Larger batch exercising the multi-tile (and v7x two-TC) path, including a
    # batch size that does not divide the tile.
    big_batch = 4136
    big_x = jax.random.normal(k_x, (big_batch, input_dim), jnp.float32)
    big_out = jax.block_until_ready(
        linear_relu(big_x, w_pad, b_pad, out_features=out_features))
    big_ref = jnp.maximum(big_x @ w_t + b, 0.0)
    assert big_out.shape == (big_batch, out_features)
    assert jnp.allclose(big_out, big_ref, atol=1e-5, rtol=1e-5)

    print("KERNEL_OK")
</pallas_src>

<mosaic_0001>
module attributes {stable_mosaic.version = 11 : i64} {
  func.func @_linear_relu_kernel(%arg0: i32, %arg1: memref<8x32xf32, #tpu.memory_space<vmem>>, %arg2: memref<32x8xf32, #tpu.memory_space<vmem>>, %arg3: memref<1x8xf32, #tpu.memory_space<vmem>>, %arg4: memref<8x8xf32, #tpu.memory_space<vmem>>) attributes {dimension_semantics = [#tpu.dimension_semantics<parallel>], iteration_bounds = array<i64: 1>, scalar_prefetch = 0 : i64, scratch_operands = 0 : i64, tpu.core_type = #tpu.core_type<tc>, window_params = [{transform_indices = @transform_0, window_bounds = array<i64: 8, 32>}, {pipeline_mode = #tpu.pipeline_mode<synchronous>, transform_indices = @transform_1, window_bounds = array<i64: 32, 8>}, {pipeline_mode = #tpu.pipeline_mode<synchronous>, transform_indices = @transform_2, window_bounds = array<i64: 1, 8>}, {transform_indices = @transform_3, window_bounds = array<i64: 8, 8>}]} {
    %c0 = arith.constant 0 : index
    %c0_0 = arith.constant 0 : index
    %0 = vector.load %arg1[%c0, %c0_0] : memref<8x32xf32, #tpu.memory_space<vmem>>, vector<8x32xf32>
    %c0_1 = arith.constant 0 : index
    %c0_2 = arith.constant 0 : index
    %1 = vector.load %arg2[%c0_1, %c0_2] : memref<32x8xf32, #tpu.memory_space<vmem>>, vector<32x8xf32>
    %cst = arith.constant dense<0.000000e+00> : vector<8x8xf32>
    %2 = tpu.matmul %0, %1, %cst {dimension_numbers = #tpu.dot_dimension_numbers<[1], [0], [0], [1], [0, 0, 1, 1], [], []>} : vector<8x32xf32>, vector<32x8xf32>, vector<8x8xf32> -> vector<8x8xf32>
    %c0_3 = arith.constant 0 : index
    %c0_4 = arith.constant 0 : index
    %3 = vector.load %arg3[%c0_3, %c0_4] : memref<1x8xf32, #tpu.memory_space<vmem>>, vector<1x8xf32>
    %4 = vector.broadcast %3 : vector<1x8xf32> to vector<8x8xf32>
    %5 = arith.addf %2, %4 : vector<8x8xf32>
    %cst_5 = arith.constant 0.000000e+00 : f32
    %6 = vector.broadcast %cst_5 : f32 to vector<8x8xf32>
    %7 = arith.maximumf %5, %6 : vector<8x8xf32>
    %c0_6 = arith.constant 0 : index
    %c0_7 = arith.constant 0 : index
    %8 = vector.load %arg4[%c0_6, %c0_7] : memref<8x8xf32, #tpu.memory_space<vmem>>, vector<8x8xf32>
    tpu.vector_store %arg4[%c0_6, %c0_7], %7 {strides = array<i32>} : memref<8x8xf32, #tpu.memory_space<vmem>>, vector<8x8xf32>,
    return
  }
  func.func @transform_0(%arg0: i32) -> (i32, i32) {
    %c0_i32 = arith.constant 0 : i32
    %c0_i32_0 = arith.constant 0 : i32
    return %arg0, %c0_i32 : i32, i32
  }
  func.func @transform_1(%arg0: i32) -> (i32, i32) {
    %c0_i32 = arith.constant 0 : i32
    %c0_i32_0 = arith.constant 0 : i32
    %c0_i32_1 = arith.constant 0 : i32
    return %c0_i32, %c0_i32_0 : i32, i32
  }
  func.func @transform_2(%arg0: i32) -> (i32, i32) {
    %c0_i32 = arith.constant 0 : i32
    %c0_i32_0 = arith.constant 0 : i32
    %c0_i32_1 = arith.constant 0 : i32
    return %c0_i32, %c0_i32_0 : i32, i32
  }
  func.func @transform_3(%arg0: i32) -> (i32, i32) {
    %c0_i32 = arith.constant 0 : i32
    %c0_i32_0 = arith.constant 0 : i32
    return %arg0, %c0_i32 : i32, i32
  }
}

</mosaic_0001>

<llo_original>
// kernel: linear_relu.1
$region0: #{linear_relu.1}
  #allocation0 [shape = 'u32[]', space=smem, size = 0x4, offset = 0x4, fixed_abs, tag = 'smem constant byte address 0x4 - core index']
  #allocation1 [shape = 'u32[144,128]{1,0:T(1,128)}', space=vmem, size = 0x12000, scoped, tag = 'internal scratch']
  %s0 = inlined_call_operand.vmem [shape: f32[8,32], index: 0, kind: input, shape index: {}]
  %s1 = inlined_call_operand.vmem [shape: f32[32,8], index: 1, kind: input, shape index: {}]
  %s2 = inlined_call_operand.vmem [shape: f32[1,8], index: 2, kind: input, shape index: {}]
  %s3 = inlined_call_operand.vmem [shape: f32[8,8], index: 3, kind: output, shape index: {}]
  %s4 = sld [smem:[#allocation0]]
  $region22: #{linear_relu.1} parent=0
    _
  %s6 = ssub.s32 1, %s4
  %s7 = scalar_select 0, %s6, %s4
  // Predicated region
  $region2: #{linear_relu.1} parent=0 // pred_check
    _
  $region3: #{linear_relu.1} parent=0 // pred_check_branch
    %9 = sbr.rel (0) target = $region5
  $region4: #{linear_relu.1} parent=0 // pred_region
    _
  $region5: #{linear_relu.1} parent=0 // pred_fallthru
    _
  // Predicated region
  $region6: #{linear_relu.1} parent=0 // pred_check
    _
  $region7: #{linear_relu.1} parent=0 // pred_check_branch
    %11 = sbr.rel (0) target = $region9
  $region8: #{linear_relu.1} parent=0 // pred_region
    _
  $region9: #{linear_relu.1} parent=0 // pred_fallthru
    _
  // Predicated region
  $region10: #{linear_relu.1} parent=0 // pred_check
    _
  $region11: #{linear_relu.1} parent=0 // pred_check_branch
    %13 = sbr.rel (0) target = $region13
  $region12: #{linear_relu.1} parent=0 // pred_region
    _
  $region13: #{linear_relu.1} parent=0 // pred_fallthru
    _
  %v14 = vld [vmem:[%s0] sm:$0xff]
  %v15 = vld [vmem:[%s1] sm:$0xff]
  %v16 = vld [vmem:[%s1 + $0x8] sm:$0xff]
  %v17 = vld [vmem:[%s1 + $0x10] sm:$0xff]
  %v18 = vld [vmem:[%s1 + $0x18] sm:$0xff]
  %v19 = vld [vmem:[%s2] sm:$0x1]
  %v21 = vlaneseq
  %v22 = vshrl.u32 %v21, 7
  %v23 = vsub.s32 0, %v22
  %v24 = vrot.slane %v19, %v23
  %vm26 = vcmask 261120
  %v28 = vsel %vm26, %v14, 0
  %30 = vmatprep.subr.mxu0 0.0
  %31 = vmatpush1.msra.mxu0 %v15
  %32 = vmatprep.subr.mxu0 0.0
  %33 = vmatpush1.msra.mxu0 %v16
  %34 = vmatprep.subr.mxu0 0.0
  %35 = vmatpush1.msra.mxu0 %v17
  %36 = vmatprep.subr.mxu0 0.0
  %37 = vmatpush1.msra.mxu0 %v18
  %38 = vmatprep.subr.mxu0 0.0
  %39 = vmatpush1.msra.mxu0 0.0
  %40 = vmatprep.subr.mxu0 0.0
  %41 = vmatpush1.msra.mxu0 0.0
  %42 = vmatprep.subr.mxu0 0.0
  %43 = vmatpush1.msra.mxu0 0.0
  %44 = vmatprep.subr.mxu0 0.0
  %45 = vmatpush1.msra.mxu0 0.0
  %46 = vmatprep.subr.mxu0 0.0
  %47 = vmatpush1.msra.mxu0 0.0
  %48 = vmatprep.subr.mxu0 0.0
  %49 = vmatpush1.msra.mxu0 0.0
  %50 = vmatprep.subr.mxu0 0.0
  %51 = vmatpush1.msra.mxu0 0.0
  %52 = vmatprep.subr.mxu0 0.0
  %53 = vmatpush1.msra.mxu0 0.0
  %54 = vmatprep.subr.mxu0 0.0
  %55 = vmatpush1.msra.mxu0 0.0
  %56 = vmatprep.subr.mxu0 0.0
  %57 = vmatpush1.msra.mxu0 0.0
  %58 = vmatprep.subr.mxu0 0.0
  %59 = vmatpush1.msra.mxu0 0.0
  %60 = vmatprep.subr.mxu0 0.0
  %61 = vmatpush1.msra.mxu0 0.0
  %62 = vmatprep.subr.mxu0 0.0
  %63 = vmatpush1.msra.mxu0 0.0
  %64 = vmatprep.subr.mxu0 0.0
  %65 = vmatpush1.msra.mxu0 0.0
  %66 = vmatprep.subr.mxu0 0.0
  %67 = vmatpush1.msra.mxu0 0.0
  %68 = vmatprep.subr.mxu0 0.0
  %69 = vmatpush1.msra.mxu0 0.0
  %70 = vmatprep.subr.mxu0 0.0
  %71 = vmatpush1.msra.mxu0 0.0
  %72 = vmatprep.subr.mxu0 0.0
  %73 = vmatpush1.msra.mxu0 0.0
  %74 = vmatprep.subr.mxu0 0.0
  %75 = vmatpush1.msra.mxu0 0.0
  %76 = vmatprep.subr.mxu0 0.0
  %77 = vmatpush1.msra.mxu0 0.0
  %78 = vmatprep.subr.mxu0 0.0
  %79 = vmatpush1.msra.mxu0 0.0
  %80 = vmatprep.subr.mxu0 0.0
  %81 = vmatpush1.msra.mxu0 0.0
  %82 = vmatprep.subr.mxu0 0.0
  %83 = vmatpush1.msra.mxu0 0.0
  %84 = vmatprep.subr.mxu0 0.0
  %85 = vmatpush1.msra.mxu0 0.0
  %86 = vmatprep.subr.mxu0 0.0
  %87 = vmatpush1.msra.mxu0 0.0
  %88 = vmatprep.subr.mxu0 0.0
  %89 = vmatpush1.msra.mxu0 0.0
  %90 = vmatprep.subr.mxu0 0.0
  %91 = vmatpush1.msra.mxu0 0.0
  %92 = vmatprep.subr.mxu0 0.0
  %93 = vmatpush1.msra.mxu0 0.0
  %94 = vmatprep.mubr.f32.mxu0 0.0
  %95 = vmatmul.mubr.f32.gmra.mrb[0].mxu0 %v28
  %v96 = vpop.f32.mrb[0].mxu0
  %v97 = vadd.f32 %v24, %v96
  %v98 = vpop.f32.mrb[0].mxu0
  %99 = vdwg.mxu0
  %v100 = vmax.f32 %v97, 0.0
  %vm101 = vcmask 64512
  %102 = vst.msk [vmem:[%s3] sm:$0xff] %vm101, %v100
  // Predicated region
  $region14: #{linear_relu.1} parent=0 // pred_check
    _
  $region15: #{linear_relu.1} parent=0 // pred_check_branch
    %104 = sbr.rel (0) target = $region17
  $region16: #{linear_relu.1} parent=0 // pred_region
    _
  $region17: #{linear_relu.1} parent=0 // pred_fallthru
    _
  // Predicated region
  $region18: #{linear_relu.1} parent=0 // pred_check
    _
  $region19: #{linear_relu.1} parent=0 // pred_check_branch
    %106 = sbr.rel (0) target = $region21
  $region20: #{linear_relu.1} parent=0 // pred_region
    _
  $region21: #{linear_relu.1} parent=0 // pred_fallthru
    _

</llo_original>
